<compile_context>
chip_gen: v6e
topology: v6e:2x2x1
jax: 0.10.0
libtpu: 0.0.40
codegen_flags: <defaults>
</compile_context>

<pallas_src>
import functools

import jax
import jax.numpy as jnp
from jax.experimental import pallas as pl
from jax.experimental.pallas import tpu as pltpu


def _round_up(x, m):
    return ((x + m - 1) // m) * m


@functools.lru_cache(maxsize=None)
def _vmem_limit_bytes():
    """Per-chip scoped-VMEM limit: physical capacity minus headroom, clamped."""
    try:
        cap = int(pltpu.get_tpu_info().vmem_capacity_bytes)
    except Exception:
        cap = 64 * (1 << 20)          # conservative fallback: v7x per-TC VMEM
    return int(min(max(cap - 8 * (1 << 20), 32 * (1 << 20)), 120 * (1 << 20)))


def _mlp_adapter_kernel(x_ref, w1_ref, b1_ref, w2_ref, b2_ref, o_ref, h_ref):
    # x : (tm, P_pad)    bf16  -- fetched once per row tile (index_map constant in j)
    # w1: (P_pad, H_pad) bf16  -- resident
    # b1: (1, H_pad)     f32   -- resident
    # w2: (H_pad, tn)    bf16  -- streamed over the E-column axis
    # b2: (1, tn)        f32   -- streamed
    # o : (tm, tn)             -- output tile
    # h : (tm, H_pad)    bf16  -- scratch, computed once per row tile
    @pl.when(pl.program_id(1) == 0)
    def _():
        h = jnp.dot(x_ref[...], w1_ref[...], preferred_element_type=jnp.float32)
        # Fused bias + ReLU + downcast: only the bf16 h stays live into dot #2.
        h_ref[...] = jnp.maximum(h + b1_ref[...], 0.0).astype(h_ref.dtype)

    y = jnp.dot(h_ref[...], w2_ref[...], preferred_element_type=jnp.float32)
    o_ref[...] = (y + b2_ref[...]).astype(o_ref.dtype)


@functools.partial(jax.jit, static_argnames=("tm", "out_dtype"))
def _mlp_adapter_jit(x, w1, b1, w2, b2, *, tm, out_dtype):
    M, P_pad = x.shape
    H_pad = w1.shape[1]
    E_pad = w2.shape[1]
    # Feature dims are pre-padded to multiples of 128 by the caller.

    # E-column tile: largest {512,256,128} divisor of E_pad (or all of E_pad if
    # small) so w2 streams as lane-dense tiles and VMEM stays bounded.
    if E_pad <= 1024:
        tn = E_pad
    elif E_pad % 512 == 0:
        tn = 512
    elif E_pad % 256 == 0:
        tn = 256
    else:
        tn = 128

    grid = (pl.cdiv(M, tm), E_pad // tn)   # partial last row tile is masked
    # TODO(synk): add an H ("arbitrary") reduction axis with a pl.when-zeroed
    # f32 accumulator if w1 (P_pad x H_pad) or the h scratch (tm x H_pad) ever
    # stop fitting a single TensorCore's VMEM.
    return pl.pallas_call(
        _mlp_adapter_kernel,
        out_shape=jax.ShapeDtypeStruct((M, E_pad), out_dtype),
        grid_spec=pltpu.PrefetchScalarGridSpec(
            num_scalar_prefetch=0,
            grid=grid,
            in_specs=[
                pl.BlockSpec((tm, P_pad), lambda i, j: (i, 0)),      # x: per row tile
                pl.BlockSpec((P_pad, H_pad), lambda i, j: (0, 0)),   # w1: resident
                pl.BlockSpec((1, H_pad), lambda i, j: (0, 0)),       # b1: resident
                pl.BlockSpec((H_pad, tn), lambda i, j: (0, j)),      # w2: streamed
                pl.BlockSpec((1, tn), lambda i, j: (0, j)),          # b2: streamed
            ],
            out_specs=pl.BlockSpec((tm, tn), lambda i, j: (i, j)),
            scratch_shapes=[pltpu.VMEM((tm, H_pad), jnp.bfloat16)],  # h scratch
        ),
        compiler_params=pltpu.CompilerParams(
            dimension_semantics=("parallel", "arbitrary"),
            vmem_limit_bytes=_vmem_limit_bytes(),
        ),
    )(x, w1, b1, w2, b2)


_TM_BUCKETS = (8, 16, 32, 64, 128, 256)


def _pick_tm(m_rows):
    """Bucketed row-tile size (tm is a static jit arg -> bounded compiles)."""
    if m_rows <= 64:
        for tm in _TM_BUCKETS:            # tiny M: one row tile
            if tm >= m_rows:
                return tm
    if m_rows <= 512:
        # Medium M: at least two row tiles so the "parallel" row axis can be
        # split across v7x's two TensorCores (no effect on v5e/v6e).
        half = -(-m_rows // 2)
        for tm in _TM_BUCKETS:
            if tm >= half:
                return tm
    return 256


def mlp_adapter(x, w1, b1, w2, b2, *, tm=None, out_dtype=jnp.bfloat16):
    """Fused Linear -> ReLU -> Linear over rows of x: (M, P_pad) -> (M, E_pad).

    Feature dims must already be 128-aligned (done once at module build time);
    the row dimension is handled with masked partial tiles (no HBM re-pad).
    """
    if tm is None:
        tm = _pick_tm(x.shape[0])
    return _mlp_adapter_jit(x, w1, b1, w2, b2, tm=tm, out_dtype=out_dtype)


class PretrainKGEmbeddingPallas:
    """JAX/Pallas port of PretrainKGEmbedding with adapter_type='mlp'.

    Numerics note: weights/activations are bf16 with f32 accumulation (biases
    f32), so results differ from the fp32 PyTorch module at bf16-level tolerance
    (validated in __main__ against both a matched-precision and an fp32 ref).
    """

    def __init__(self, pretrain_ent_embs, dim_llm, num_prefix=1, key=None,
                 out_dtype=jnp.bfloat16):
        self.num_prefix = num_prefix
        self.llm_dim = dim_llm
        self.emb_dim = num_prefix * dim_llm
        self.pretrain_dim = pretrain_ent_embs.shape[1]
        self.out_dtype = out_dtype

        P, H, E = self.pretrain_dim, 3 * self.emb_dim, self.emb_dim
        P_pad = _round_up(P, 128)
        H_pad = _round_up(H, 128)
        E_pad = _round_up(E, 128)
        self._e_pad = E_pad

        # Frozen embedding table: bf16 (halves gather + x-stream HBM bytes),
        # columns padded ONCE so gathered rows are already lane-aligned.
        table = jnp.asarray(pretrain_ent_embs, jnp.bfloat16)
        if P_pad != P:
            table = jnp.pad(table, ((0, 0), (0, P_pad - P)))
        self.embeddings = table

        if key is None:
            key = jax.random.PRNGKey(0)
        k1, k2 = jax.random.split(key)
        # Deterministic synthetic init (std=0.02 normal weights, zero biases).
        # Weights padded once at construction; zero-padded rows/cols are
        # mathematically inert (zero bias on padded lanes, ReLU kills them).
        w1 = 0.02 * jax.random.normal(k1, (P, H), jnp.float32)
        w2 = 0.02 * jax.random.normal(k2, (H, E), jnp.float32)
        self.w1 = jnp.pad(w1, ((0, P_pad - P), (0, H_pad - H))).astype(jnp.bfloat16)
        self.b1 = jnp.zeros((1, H_pad), jnp.float32)
        self.w2 = jnp.pad(w2, ((0, H_pad - H), (0, E_pad - E))).astype(jnp.bfloat16)
        self.b2 = jnp.zeros((1, E_pad), jnp.float32)

    def __call__(self, triple_ids):
        # triple_ids: (B, T) int32
        batch_size, num_token = triple_ids.shape
        ent = triple_ids.reshape(-1, num_token)
        # TODO(synk): fuse this gather into the kernel (scalar-prefetch ids +
        # manual make_async_copy from a memory_space=pl.ANY table) to skip one
        # HBM round trip of the (B*T, P) activations at large B*T.
        emb = jnp.take(self.embeddings, ent, axis=0)            # (B, T, P_pad) bf16
        x = emb.reshape(-1, self.embeddings.shape[1])           # (B*T, P_pad)
        y = mlp_adapter(x, self.w1, self.b1, self.w2, self.b2,
                        out_dtype=self.out_dtype)               # (B*T, E_pad)
        if self._e_pad != self.emb_dim:
            y = y[:, : self.emb_dim]
        return y.reshape(batch_size, -1, self.llm_dim)          # (B, T*num_prefix, llm_dim)


if __name__ == "__main__":
    key = jax.random.PRNGKey(0)
    k_emb, k_ids, k_params = jax.random.split(key, 3)

    # Small, TPU-tile-friendly shapes.
    NUM_ENTS = 64
    PRETRAIN_DIM = 128
    DIM_LLM = 64
    NUM_PREFIX = 2          # emb_dim = 128, hidden = 384
    B, T = 2, 8             # M = B*T = 16 rows -> single row tile, tm=16

    pretrain_ent_embs = jax.random.normal(k_emb, (NUM_ENTS, PRETRAIN_DIM), jnp.float32)
    triple_ids = jax.random.randint(k_ids, (B, T), 0, NUM_ENTS, dtype=jnp.int32)

    model = PretrainKGEmbeddingPallas(pretrain_ent_embs, dim_llm=DIM_LLM,
                                      num_prefix=NUM_PREFIX, key=k_params)

    out = model(triple_ids)
    out = jax.block_until_ready(out)
    assert out.shape == (B, T * NUM_PREFIX, DIM_LLM), out.shape
    out_f32 = out.astype(jnp.float32)

    # Reference 1: pure-JAX math matching the kernel's bf16/f32-accum numerics.
    x_bf = jnp.take(model.embeddings[:, :PRETRAIN_DIM], triple_ids,
                    axis=0).reshape(-1, PRETRAIN_DIM)
    h = jnp.dot(x_bf, model.w1[:PRETRAIN_DIM, :],
                preferred_element_type=jnp.float32) + model.b1
    h = jnp.maximum(h, 0.0).astype(jnp.bfloat16)
    ref = jnp.dot(h, model.w2, preferred_element_type=jnp.float32) + model.b2
    ref = ref[:, : model.emb_dim].reshape(B, -1, DIM_LLM)
    err_matched = float(jnp.max(jnp.abs(out_f32 - ref)))
    assert err_matched < 2e-2, err_matched

    # Reference 2: full-fp32 math (documents/validates the bf16-vs-fp32 gap).
    x32 = jnp.take(pretrain_ent_embs, triple_ids, axis=0).reshape(-1, PRETRAIN_DIM)
    h32 = jnp.maximum(x32 @ model.w1[:PRETRAIN_DIM, :].astype(jnp.float32)
                      + model.b1, 0.0)
    ref32 = (h32 @ model.w2.astype(jnp.float32) + model.b2)[:, : model.emb_dim]
    ref32 = ref32.reshape(B, -1, DIM_LLM)
    err_f32 = float(jnp.max(jnp.abs(out_f32 - ref32)))
    assert err_f32 < 5e-2, err_f32

    print("KERNEL_OK")
</pallas_src>

<mosaic_0001>
module attributes {stable_mosaic.version = 11 : i64} {
  func.func @_mlp_adapter_kernel(%arg0: i32, %arg1: i32, %arg2: memref<16x128xbf16, #tpu.memory_space<vmem>>, %arg3: memref<128x384xbf16, #tpu.memory_space<vmem>>, %arg4: memref<1x384xf32, #tpu.memory_space<vmem>>, %arg5: memref<384x128xbf16, #tpu.memory_space<vmem>>, %arg6: memref<1x128xf32, #tpu.memory_space<vmem>>, %arg7: memref<16x128xbf16, #tpu.memory_space<vmem>>, %arg8: memref<16x384xbf16, #tpu.memory_space<vmem>>) attributes {dimension_semantics = [#tpu.dimension_semantics<parallel>, #tpu.dimension_semantics<arbitrary>], iteration_bounds = array<i64: 1, 1>, scalar_prefetch = 0 : i64, scratch_operands = 1 : i64, tpu.core_type = #tpu.core_type<tc>, window_params = [{transform_indices = @transform_0, window_bounds = array<i64: 16, 128>}, {pipeline_mode = #tpu.pipeline_mode<synchronous>, transform_indices = @transform_1, window_bounds = array<i64: 128, 384>}, {pipeline_mode = #tpu.pipeline_mode<synchronous>, transform_indices = @transform_2, window_bounds = array<i64: 1, 384>}, {transform_indices = @transform_3, window_bounds = array<i64: 384, 128>}, {transform_indices = @transform_4, window_bounds = array<i64: 1, 128>}, {transform_indices = @transform_5, window_bounds = array<i64: 16, 128>}]} {
    %c0_i32 = arith.constant 0 : i32
    %0 = arith.cmpi eq, %arg1, %c0_i32 : i32
    %1 = arith.extui %0 : i1 to i32
    %c0_i32_0 = arith.constant 0 : i32
    %2 = arith.cmpi ne, %1, %c0_i32_0 : i32
    scf.if %2 {
      %c0_8 = arith.constant 0 : index
      %c0_9 = arith.constant 0 : index
      %11 = vector.load %arg2[%c0_8, %c0_9] : memref<16x128xbf16, #tpu.memory_space<vmem>>, vector<16x128xbf16>
      %c0_10 = arith.constant 0 : index
      %c0_11 = arith.constant 0 : index
      %12 = vector.load %arg3[%c0_10, %c0_11] : memref<128x384xbf16, #tpu.memory_space<vmem>>, vector<128x384xbf16>
      %cst_12 = arith.constant dense<0.000000e+00> : vector<16x384xf32>
      %13 = tpu.matmul %11, %12, %cst_12 {dimension_numbers = #tpu.dot_dimension_numbers<[1], [0], [0], [1], [0, 0, 1, 1], [], []>} : vector<16x128xbf16>, vector<128x384xbf16>, vector<16x384xf32> -> vector<16x384xf32>
      %c0_13 = arith.constant 0 : index
      %c0_14 = arith.constant 0 : index
      %14 = vector.load %arg4[%c0_13, %c0_14] : memref<1x384xf32, #tpu.memory_space<vmem>>, vector<1x384xf32>
      %15 = vector.broadcast %14 : vector<1x384xf32> to vector<16x384xf32>
      %16 = arith.addf %13, %15 : vector<16x384xf32>
      %cst_15 = arith.constant 0.000000e+00 : f32
      %17 = vector.broadcast %cst_15 : f32 to vector<16x384xf32>
      %18 = arith.maximumf %16, %17 : vector<16x384xf32>
      %19 = arith.truncf %18 : vector<16x384xf32> to vector<16x384xbf16>
      %c0_16 = arith.constant 0 : index
      %c0_17 = arith.constant 0 : index
      %20 = vector.load %arg8[%c0_16, %c0_17] : memref<16x384xbf16, #tpu.memory_space<vmem>>, vector<16x384xbf16>
      tpu.vector_store %arg8[%c0_16, %c0_17], %19 {strides = array<i32>} : memref<16x384xbf16, #tpu.memory_space<vmem>>, vector<16x384xbf16>,
    } else {
    }
    %c0 = arith.constant 0 : index
    %c0_1 = arith.constant 0 : index
    %3 = vector.load %arg8[%c0, %c0_1] : memref<16x384xbf16, #tpu.memory_space<vmem>>, vector<16x384xbf16>
    %c0_2 = arith.constant 0 : index
    %c0_3 = arith.constant 0 : index
    %4 = vector.load %arg5[%c0_2, %c0_3] : memref<384x128xbf16, #tpu.memory_space<vmem>>, vector<384x128xbf16>
    %cst = arith.constant dense<0.000000e+00> : vector<16x128xf32>
    %5 = tpu.matmul %3, %4, %cst {dimension_numbers = #tpu.dot_dimension_numbers<[1], [0], [0], [1], [0, 0, 1, 1], [], []>} : vector<16x384xbf16>, vector<384x128xbf16>, vector<16x128xf32> -> vector<16x128xf32>
    %c0_4 = arith.constant 0 : index
    %c0_5 = arith.constant 0 : index
    %6 = vector.load %arg6[%c0_4, %c0_5] : memref<1x128xf32, #tpu.memory_space<vmem>>, vector<1x128xf32>
    %7 = vector.broadcast %6 : vector<1x128xf32> to vector<16x128xf32>
    %8 = arith.addf %5, %7 : vector<16x128xf32>
    %9 = arith.truncf %8 : vector<16x128xf32> to vector<16x128xbf16>
    %c0_6 = arith.constant 0 : index
    %c0_7 = arith.constant 0 : index
    %10 = vector.load %arg7[%c0_6, %c0_7] : memref<16x128xbf16, #tpu.memory_space<vmem>>, vector<16x128xbf16>
    tpu.vector_store %arg7[%c0_6, %c0_7], %9 {strides = array<i32>} : memref<16x128xbf16, #tpu.memory_space<vmem>>, vector<16x128xbf16>,
    return
  }
  func.func @transform_0(%arg0: i32, %arg1: i32) -> (i32, i32) {
    %c0_i32 = arith.constant 0 : i32
    %c0_i32_0 = arith.constant 0 : i32
    return %arg0, %c0_i32 : i32, i32
  }
  func.func @transform_1(%arg0: i32, %arg1: i32) -> (i32, i32) {
    %c0_i32 = arith.constant 0 : i32
    %c0_i32_0 = arith.constant 0 : i32
    %c0_i32_1 = arith.constant 0 : i32
    return %c0_i32, %c0_i32_0 : i32, i32
  }
  func.func @transform_2(%arg0: i32, %arg1: i32) -> (i32, i32) {
    %c0_i32 = arith.constant 0 : i32
    %c0_i32_0 = arith.constant 0 : i32
    %c0_i32_1 = arith.constant 0 : i32
    return %c0_i32, %c0_i32_0 : i32, i32
  }
  func.func @transform_3(%arg0: i32, %arg1: i32) -> (i32, i32) {
    %c0_i32 = arith.constant 0 : i32
    %c0_i32_0 = arith.constant 0 : i32
    return %c0_i32, %arg1 : i32, i32
  }
  func.func @transform_4(%arg0: i32, %arg1: i32) -> (i32, i32) {
    %c0_i32 = arith.constant 0 : i32
    %c0_i32_0 = arith.constant 0 : i32
    return %c0_i32, %arg1 : i32, i32
  }
  func.func @transform_5(%arg0: i32, %arg1: i32) -> (i32, i32) {
    %c0_i32 = arith.constant 0 : i32
    return %arg0, %arg1 : i32, i32
  }
}

</mosaic_0001>

<llo_original>
// kernel: _mlp_adapter_jit.1
$region0: #{_mlp_adapter_jit.1}
  #allocation0 [shape = 'u32[]', space=smem, size = 0x4, offset = 0x4, fixed_abs, tag = 'smem constant byte address 0x4 - core index']
  #allocation1 [shape = 'u32[144,128]{1,0:T(1,128)}', space=vmem, size = 0x12000, scoped, tag = 'internal scratch']
  #allocation2 [shape = 'bf16[16,384]{1,0:T(8,128)(2,1)}', space=vmem, size = 0x3000, scoped, tag = 'scratch operand']
  %s0 = inlined_call_operand.hbm [shape: bf16[16,128], index: 0, kind: input, shape index: {}]
  %s1 = inlined_call_operand.hbm [shape: bf16[128,384], index: 1, kind: input, shape index: {}]
  %s2 = inlined_call_operand.vmem [shape: f32[1,384], index: 2, kind: input, shape index: {}]
  %s3 = inlined_call_operand.hbm [shape: bf16[384,128], index: 3, kind: input, shape index: {}]
  %s4 = inlined_call_operand.vmem [shape: f32[1,128], index: 4, kind: input, shape index: {}]
  %s5 = inlined_call_operand.hbm [shape: bf16[16,128], index: 5, kind: output, shape index: {}]
  %s6 = sld [smem:[#allocation0]]
  $region46: #{_mlp_adapter_jit.1} parent=0
    _
  %s8 = ssub.s32 1, %s6
  %s9 = scalar_select 0, %s8, %s6
  $region1: #{_mlp_adapter_jit.1} parent=0
    #allocation3 [shape = 'u8[4096]{0}', space=vmem, size = 0x1000, scoped, tag = 'input window, operand 0, single buffered']
    #allocation4 [shape = 's32[1]{0}', space=sflag, size = 0x4, scoped, tag = 'scoped memory for _mlp_adapter_jit.1']
    #allocation5 [shape = 's32[1]{0}', space=sflag, size = 0x4, scoped, tag = 'scoped memory for _mlp_adapter_jit.1']
    #allocation6 [shape = 'u8[98304]{0}', space=vmem, size = 0x18000, scoped, tag = 'input window, operand 1, single buffered']
    #allocation7 [shape = 's32[1]{0}', space=sflag, size = 0x4, scoped, tag = 'scoped memory for _mlp_adapter_jit.1']
    #allocation8 [shape = 'u8[98304]{0}', space=vmem, size = 0x18000, scoped, tag = 'input window, operand 3, single buffered']
    #allocation9 [shape = 'u8[4096]{0}', space=vmem, size = 0x1000, scoped, tag = 'output window, operand 0, single buffered']
    %10 = vsyncpa [#allocation4], 0
    %11 = vsyncpa [#allocation7], 0
    %12 = vsyncpa [#allocation5], 0
    // Predicated region
    $region2: #{_mlp_adapter_jit.1} parent=1 // pred_check
      _
    $region3: #{_mlp_adapter_jit.1} parent=1 // pred_check_branch
      %14 = sbr.rel (0) target = $region5
    $region4: #{_mlp_adapter_jit.1} parent=1 // pred_region
      %s16 = ssub.s32 128, 128
      %17 = vsyncadd [#allocation4], %s16
      %s18 = sshll.u32 [#allocation3], 4
      %s19 = int_to_ptr.vmem [resolvable:$true] %s18
      %24 = dma.hbm_to_vmem [thread:$0]  %s0, 128, %s19, [#allocation4], 64, 64, 4
    $region5: #{_mlp_adapter_jit.1} parent=1 // pred_fallthru
      _
    // Predicated region
    $region6: #{_mlp_adapter_jit.1} parent=1 // pred_check
      _
    $region7: #{_mlp_adapter_jit.1} parent=1 // pred_check_branch
      %26 = sbr.rel (0) target = $region9
    $region8: #{_mlp_adapter_jit.1} parent=1 // pred_region
      %s28 = ssub.s32 3072, 3072
      %29 = vsyncadd [#allocation7], %s28
      %s30 = sshll.u32 [#allocation6], 4
      %s31 = int_to_ptr.vmem [resolvable:$true] %s30
      %36 = dma.hbm_to_vmem [thread:$0]  %s1, 3072, %s31, [#allocation7], 192, 192, 12
    $region9: #{_mlp_adapter_jit.1} parent=1 // pred_fallthru
      _
    // Predicated region
    $region10: #{_mlp_adapter_jit.1} parent=1 // pred_check
      _
    $region11: #{_mlp_adapter_jit.1} parent=1 // pred_check_branch
      %38 = sbr.rel (0) target = $region13
    $region12: #{_mlp_adapter_jit.1} parent=1 // pred_region
      _
    $region13: #{_mlp_adapter_jit.1} parent=1 // pred_fallthru
      _
    // Predicated region
    $region14: #{_mlp_adapter_jit.1} parent=1 // pred_check
      _
    $region15: #{_mlp_adapter_jit.1} parent=1 // pred_check_branch
      %40 = sbr.rel (0) target = $region17
    $region16: #{_mlp_adapter_jit.1} parent=1 // pred_region
      %s42 = ssub.s32 3072, 3072
      %43 = vsyncadd [#allocation7], %s42
      %s44 = sshll.u32 [#allocation8], 4
      %s45 = int_to_ptr.vmem [resolvable:$true] %s44
      %50 = dma.hbm_to_vmem [thread:$0]  %s3, 3072, %s45, [#allocation7], 64, 64, 4
    $region17: #{_mlp_adapter_jit.1} parent=1 // pred_fallthru
      _
    // Predicated region
    $region18: #{_mlp_adapter_jit.1} parent=1 // pred_check
      _
    $region19: #{_mlp_adapter_jit.1} parent=1 // pred_check_branch
      %52 = sbr.rel (0) target = $region21
    $region20: #{_mlp_adapter_jit.1} parent=1 // pred_region
      _
    $region21: #{_mlp_adapter_jit.1} parent=1 // pred_fallthru
      _
    // Predicated region
    $region22: #{_mlp_adapter_jit.1} parent=1 // pred_check
      _
    $region23: #{_mlp_adapter_jit.1} parent=1 // pred_check_branch
      %54 = sbr.rel (0) target = $region25
    $region24: #{_mlp_adapter_jit.1} parent=1 // pred_region
      %55 = dma.done [#allocation4], 128
    $region25: #{_mlp_adapter_jit.1} parent=1 // pred_fallthru
      _
    // Predicated region
    $region26: #{_mlp_adapter_jit.1} parent=1 // pred_check
      _
    $region27: #{_mlp_adapter_jit.1} parent=1 // pred_check_branch
      %57 = sbr.rel (0) target = $region29
    $region28: #{_mlp_adapter_jit.1} parent=1 // pred_region
      %58 = dma.done [#allocation7], 3072
    $region29: #{_mlp_adapter_jit.1} parent=1 // pred_fallthru
      _
    // Predicated region
    $region30: #{_mlp_adapter_jit.1} parent=1 // pred_check
      _
    $region31: #{_mlp_adapter_jit.1} parent=1 // pred_check_branch
      %60 = sbr.rel (0) target = $region33
    $region32: #{_mlp_adapter_jit.1} parent=1 // pred_region
      %61 = dma.done [#allocation7], 3072
    $region33: #{_mlp_adapter_jit.1} parent=1 // pred_fallthru
      _
    %p63 = scmp.eq.s32.totalorder 0, 0
    // Predicated region
    $region34: #{_mlp_adapter_jit.1} parent=1 // pred_check
      %p64 = pneg %p63
    $region35: #{_mlp_adapter_jit.1} parent=1 // pred_check_branch
      %66 = sbr.rel (%p64) target = $region37
    $region36: #{_mlp_adapter_jit.1} parent=1 // pred_region
      %v67 = vld [vmem:[#allocation3] sm:$0xf]
      %v68 = vld [vmem:[#allocation3 + $0x4] sm:$0xf]
      %v69 = vld [vmem:[#allocation6] sm:$0xff]
      %v70 = vld [vmem:[#allocation6 + $0x8] sm:$0xf]
      %v71 = vld [vmem:[#allocation6 + $0xc] sm:$0xff]
      %v72 = vld [vmem:[#allocation6 + $0x14] sm:$0xf]
      %v73 = vld [vmem:[#allocation6 + $0x18] sm:$0xff]
      %v74 = vld [vmem:[#allocation6 + $0x20] sm:$0xf]
      %v75 = vld [vmem:[#allocation6 + $0x24] sm:$0xff]
      %v76 = vld [vmem:[#allocation6 + $0x2c] sm:$0xf]
      %v77 = vld [vmem:[#allocation6 + $0x30] sm:$0xff]
      %v78 = vld [vmem:[#allocation6 + $0x38] sm:$0xf]
      %v79 = vld [vmem:[#allocation6 + $0x3c] sm:$0xff]
      %v80 = vld [vmem:[#allocation6 + $0x44] sm:$0xf]
      %v81 = vld [vmem:[#allocation6 + $0x48] sm:$0xff]
      %v82 = vld [vmem:[#allocation6 + $0x50] sm:$0xf]
      %v83 = vld [vmem:[#allocation6 + $0x54] sm:$0xff]
      %v84 = vld [vmem:[#allocation6 + $0x5c] sm:$0xf]
      %v85 = vld [vmem:[#allocation6 + $0x60] sm:$0xff]
      %v86 = vld [vmem:[#allocation6 + $0x68] sm:$0xf]
      %v87 = vld [vmem:[#allocation6 + $0x6c] sm:$0xff]
      %v88 = vld [vmem:[#allocation6 + $0x74] sm:$0xf]
      %v89 = vld [vmem:[#allocation6 + $0x78] sm:$0xff]
      %v90 = vld [vmem:[#allocation6 + $0x80] sm:$0xf]
      %v91 = vld [vmem:[#allocation6 + $0x84] sm:$0xff]
      %v92 = vld [vmem:[#allocation6 + $0x8c] sm:$0xf]
      %v93 = vld [vmem:[#allocation6 + $0x90] sm:$0xff]
      %v94 = vld [vmem:[#allocation6 + $0x98] sm:$0xf]
      %v95 = vld [vmem:[#allocation6 + $0x9c] sm:$0xff]
      %v96 = vld [vmem:[#allocation6 + $0xa4] sm:$0xf]
      %v97 = vld [vmem:[#allocation6 + $0xa8] sm:$0xff]
      %v98 = vld [vmem:[#allocation6 + $0xb0] sm:$0xf]
      %v99 = vld [vmem:[#allocation6 + $0xb4] sm:$0xff]
      %v100 = vld [vmem:[#allocation6 + $0xbc] sm:$0xf]
      %v101 = vld [vmem:[%s2] sm:$0x7]
      %v103 = vlaneseq
      %v104 = vshrl.u32 %v103, 7
      %v105 = vsub.s32 0, %v104
      %v106 = vrot.slane %v101, %v105
      %v107 = vlaneseq
      %v108 = vshrl.u32 %v107, 7
      %v109 = vsub.s32 1, %v108
      %v110 = vrot.slane %v101, %v109
      %v111 = vlaneseq
      %v112 = vshrl.u32 %v111, 7
      %v113 = vsub.s32 2, %v112
      %v114 = vrot.slane %v101, %v113
      %v120 = vunpack.c.l.b16 %v67
      %v121 = vunpack.c.l.b16 %v68
      %v122 = vpack.c.b16 %v121, %v120
      %v156 = vunpack.c.l.b16 %v69
      %v157 = vunpack.c.h.b16 %v69
      %v158 = vunpack.c.l.b16 %v70
      %v159 = vunpack.c.l.b16 %v71
      %v160 = vunpack.c.h.b16 %v71
      %v161 = vunpack.c.l.b16 %v72
      %v162 = vunpack.c.l.b16 %v73
      %v163 = vunpack.c.h.b16 %v73
      %v164 = vunpack.c.l.b16 %v74
      %v165 = vunpack.c.l.b16 %v75
      %v166 = vunpack.c.h.b16 %v75
      %v167 = vunpack.c.l.b16 %v76
      %v168 = vunpack.c.l.b16 %v77
      %v169 = vunpack.c.h.b16 %v77
      %v170 = vunpack.c.l.b16 %v78
      %v171 = vunpack.c.l.b16 %v79
      %v172 = vunpack.c.h.b16 %v79
      %v173 = vunpack.c.l.b16 %v80
      %v174 = vunpack.c.l.b16 %v81
      %v175 = vunpack.c.h.b16 %v81
      %v176 = vunpack.c.l.b16 %v82
      %v177 = vunpack.c.l.b16 %v83
      %v178 = vunpack.c.h.b16 %v83
      %v179 = vunpack.c.l.b16 %v84
      %v180 = vunpack.c.l.b16 %v85
      %v181 = vunpack.c.h.b16 %v85
      %v182 = vunpack.c.l.b16 %v86
      %v183 = vunpack.c.l.b16 %v87
      %v184 = vunpack.c.h.b16 %v87
      %v185 = vunpack.c.l.b16 %v88
      %v186 = vunpack.c.l.b16 %v89
      %v187 = vunpack.c.h.b16 %v89
      %v188 = vunpack.c.l.b16 %v90
      %v189 = vunpack.c.l.b16 %v91
      %v190 = vunpack.c.h.b16 %v91
      %v191 = vunpack.c.l.b16 %v92
      %v192 = vunpack.c.l.b16 %v93
      %v193 = vunpack.c.h.b16 %v93
      %v194 = vunpack.c.l.b16 %v94
      %v195 = vunpack.c.l.b16 %v95
      %v196 = vunpack.c.h.b16 %v95
      %v197 = vunpack.c.l.b16 %v96
      %v198 = vunpack.c.l.b16 %v97
      %v199 = vunpack.c.h.b16 %v97
      %v200 = vunpack.c.l.b16 %v98
      %v201 = vunpack.c.l.b16 %v99
      %v202 = vunpack.c.h.b16 %v99
      %v203 = vunpack.c.l.b16 %v100
      %v204 = vpack.c.b16 %v159, %v156
      %v205 = vpack.c.b16 %v160, %v157
      %v206 = vpack.c.b16 %v161, %v158
      %v207 = vpack.c.b16 %v165, %v162
      %v208 = vpack.c.b16 %v166, %v163
      %v209 = vpack.c.b16 %v167, %v164
      %v210 = vpack.c.b16 %v171, %v168
      %v211 = vpack.c.b16 %v172, %v169
      %v212 = vpack.c.b16 %v173, %v170
      %v213 = vpack.c.b16 %v177, %v174
      %v214 = vpack.c.b16 %v178, %v175
      %v215 = vpack.c.b16 %v179, %v176
      %v216 = vpack.c.b16 %v183, %v180
      %v217 = vpack.c.b16 %v184, %v181
      %v218 = vpack.c.b16 %v185, %v182
      %v219 = vpack.c.b16 %v189, %v186
      %v220 = vpack.c.b16 %v190, %v187
      %v221 = vpack.c.b16 %v191, %v188
      %v222 = vpack.c.b16 %v195, %v192
      %v223 = vpack.c.b16 %v196, %v193
      %v224 = vpack.c.b16 %v197, %v194
      %v225 = vpack.c.b16 %v201, %v198
      %v226 = vpack.c.b16 %v202, %v199
      %v227 = vpack.c.b16 %v203, %v200
      %252 = vmatprep.subr.bf16.mxu0 %v226
      %253 = vmatpush1.bf16.msra.mxu0 %v225
      %254 = vmatprep.subr.bf16.mxu0 %v223
      %255 = vmatpush1.bf16.msra.mxu0 %v222
      %256 = vmatprep.subr.bf16.mxu0 %v220
      %257 = vmatpush1.bf16.msra.mxu0 %v219
      %258 = vmatprep.subr.bf16.mxu0 %v217
      %259 = vmatpush1.bf16.msra.mxu0 %v216
      %260 = vmatprep.subr.bf16.mxu0 %v214
      %261 = vmatpush1.bf16.msra.mxu0 %v213
      %262 = vmatprep.subr.bf16.mxu0 %v211
      %263 = vmatpush1.bf16.msra.mxu0 %v210
      %264 = vmatprep.subr.bf16.mxu0 %v208
      %265 = vmatpush1.bf16.msra.mxu0 %v207
      %266 = vmatprep.subr.bf16.mxu0 %v205
      %267 = vmatpush1.bf16.msra.mxu0 %v204
      %268 = vmatprep.subr.bf16.mxu0 0
      %269 = vmatpush2.bf16.msra.mxu0 0
      %270 = vmatprep.subr.bf16.mxu0 0
      %271 = vmatpush2.bf16.msra.mxu0 0
      %272 = vmatprep.subr.bf16.mxu0 0
      %273 = vmatpush2.bf16.msra.mxu0 0
      %274 = vmatprep.subr.bf16.mxu0 0
      %275 = vmatpush2.bf16.msra.mxu0 0
      %276 = vmatprep.subr.bf16.mxu0 0
      %277 = vmatpush2.bf16.msra.mxu0 0
      %278 = vmatprep.subr.bf16.mxu0 0
      %279 = vmatpush2.bf16.msra.mxu0 0
      %280 = vmatprep.subr.bf16.mxu0 0
      %281 = vmatpush2.bf16.msra.mxu0 0
      %282 = vmatprep.subr.bf16.mxu0 0
      %283 = vmatpush2.bf16.msra.mxu0 0
      %284 = vmatprep.mubr.bf16.mxu0 0
      %285 = vmatmul.mubr.bf16.gmra.mxu0 %v122
      %v286 = vpop.f32.mrf.mxu0
      %v287 = vadd.f32 %v106, %v286
      %v288 = vpop.f32.mrf.mxu0
      %v289 = vadd.f32 %v110, %v288
      %v290 = vpop.f32.mrf.mxu0
      %v291 = vadd.f32 %v106, %v290
      %v292 = vpop.f32.mrf.mxu0
      %v293 = vadd.f32 %v110, %v292
      %294 = vdwg.mxu0
      %295 = vmatprep.subr.bf16.mxu0 0
      %296 = vmatpush1.bf16.msra.mxu0 %v227
      %297 = vmatprep.subr.bf16.mxu0 0
      %298 = vmatpush1.bf16.msra.mxu0 %v224
      %299 = vmatprep.subr.bf16.mxu0 0
      %300 = vmatpush1.bf16.msra.mxu0 %v221
      %301 = vmatprep.subr.bf16.mxu0 0
      %302 = vmatpush1.bf16.msra.mxu0 %v218
      %303 = vmatprep.subr.bf16.mxu0 0
      %304 = vmatpush1.bf16.msra.mxu0 %v215
      %305 = vmatprep.subr.bf16.mxu0 0
      %306 = vmatpush1.bf16.msra.mxu0 %v212
      %307 = vmatprep.subr.bf16.mxu0 0
      %308 = vmatpush1.bf16.msra.mxu0 %v209
      %309 = vmatprep.subr.bf16.mxu0 0
      %310 = vmatpush1.bf16.msra.mxu0 %v206
      %311 = vmatprep.subr.bf16.mxu0 0
      %312 = vmatpush2.bf16.msra.mxu0 0
      %313 = vmatprep.subr.bf16.mxu0 0
      %314 = vmatpush2.bf16.msra.mxu0 0
      %315 = vmatprep.subr.bf16.mxu0 0
      %316 = vmatpush2.bf16.msra.mxu0 0
      %317 = vmatprep.subr.bf16.mxu0 0
      %318 = vmatpush2.bf16.msra.mxu0 0
      %319 = vmatprep.subr.bf16.mxu0 0
      %320 = vmatpush2.bf16.msra.mxu0 0
      %321 = vmatprep.subr.bf16.mxu0 0
      %322 = vmatpush2.bf16.msra.mxu0 0
      %323 = vmatprep.subr.bf16.mxu0 0
      %324 = vmatpush2.bf16.msra.mxu0 0
      %325 = vmatprep.subr.bf16.mxu0 0
      %326 = vmatpush2.bf16.msra.mxu0 0
      %327 = vmatprep.mubr.bf16.mxu0 0
      %328 = vmatmul.mubr.bf16.gmra.mxu0 %v122
      %v329 = vpop.f32.mrf.mxu0
      %v330 = vadd.f32 %v114, %v329
      %v331 = vpop.f32.mrf.mxu0
      %v332 = vpop.f32.mrf.mxu0
      %v333 = vadd.f32 %v114, %v332
      %v334 = vpop.f32.mrf.mxu0
      %335 = vdwg.mxu0
      %v336 = vmax.f32 %v287, 0.0
      %v337 = vmax.f32 %v289, 0.0
      %v338 = vmax.f32 %v330, 0.0
      %v339 = vmax.f32 %v291, 0.0
      %v340 = vmax.f32 %v293, 0.0
      %v341 = vmax.f32 %v333, 0.0
      %v342 = vpack.c.bf16 %v339, %v336
      %v343 = vpack.c.bf16 %v340, %v337
      %v344 = vpack.c.bf16 %v341, %v338
      %v348 = vunpack.c.l.b16 %v342
      %v349 = vunpack.c.l.b16 %v343
      %v350 = vunpack.c.l.b16 %v344
      %v351 = vunpack.c.h.b16 %v342
      %v352 = vunpack.c.h.b16 %v343
      %v353 = vunpack.c.h.b16 %v344
      %v354 = vpack.c.b16 %v349, %v348
      %v355 = vpack.c.b16 %v350, %v350
      %v356 = vpack.c.b16 %v352, %v351
      %v357 = vpack.c.b16 %v353, %v353
      %362 = vst [vmem:[#allocation2] sm:$0xff] %v354
      %363 = vst [vmem:[#allocation2 + $0x8] sm:$0xf] %v355
      %364 = vst [vmem:[#allocation2 + $0xc] sm:$0xff] %v356
      %365 = vst [vmem:[#allocation2 + $0x14] sm:$0xf] %v357
    $region37: #{_mlp_adapter_jit.1} parent=1 // pred_fallthru
      _
    %v366 = vld [vmem:[#allocation2] sm:$0xff]
    %v367 = vld [vmem:[#allocation2 + $0x8] sm:$0xf]
    %v368 = vld [vmem:[#allocation2 + $0xc] sm:$0xff]
    %v369 = vld [vmem:[#allocation2 + $0x14] sm:$0xf]
    %v370 = vld [vmem:[#allocation8] sm:$0xf]
    %v371 = vld [vmem:[#allocation8 + $0x4] sm:$0xf]
    %v372 = vld [vmem:[#allocation8 + $0x8] sm:$0xf]
    %v373 = vld [vmem:[#allocation8 + $0xc] sm:$0xf]
    %v374 = vld [vmem:[#allocation8 + $0x10] sm:$0xf]
    %v375 = vld [vmem:[#allocation8 + $0x14] sm:$0xf]
    %v376 = vld [vmem:[#allocation8 + $0x18] sm:$0xf]
    %v377 = vld [vmem:[#allocation8 + $0x1c] sm:$0xf]
    %v378 = vld [vmem:[#allocation8 + $0x20] sm:$0xf]
    %v379 = vld [vmem:[#allocation8 + $0x24] sm:$0xf]
    %v380 = vld [vmem:[#allocation8 + $0x28] sm:$0xf]
    %v381 = vld [vmem:[#allocation8 + $0x2c] sm:$0xf]
    %v382 = vld [vmem:[#allocation8 + $0x30] sm:$0xf]
    %v383 = vld [vmem:[#allocation8 + $0x34] sm:$0xf]
    %v384 = vld [vmem:[#allocation8 + $0x38] sm:$0xf]
    %v385 = vld [vmem:[#allocation8 + $0x3c] sm:$0xf]
    %v386 = vld [vmem:[#allocation8 + $0x40] sm:$0xf]
    %v387 = vld [vmem:[#allocation8 + $0x44] sm:$0xf]
    %v388 = vld [vmem:[#allocation8 + $0x48] sm:$0xf]
    %v389 = vld [vmem:[#allocation8 + $0x4c] sm:$0xf]
    %v390 = vld [vmem:[#allocation8 + $0x50] sm:$0xf]
    %v391 = vld [vmem:[#allocation8 + $0x54] sm:$0xf]
    %v392 = vld [vmem:[#allocation8 + $0x58] sm:$0xf]
    %v393 = vld [vmem:[#allocation8 + $0x5c] sm:$0xf]
    %v394 = vld [vmem:[#allocation8 + $0x60] sm:$0xf]
    %v395 = vld [vmem:[#allocation8 + $0x64] sm:$0xf]
    %v396 = vld [vmem:[#allocation8 + $0x68] sm:$0xf]
    %v397 = vld [vmem:[#allocation8 + $0x6c] sm:$0xf]
    %v398 = vld [vmem:[#allocation8 + $0x70] sm:$0xf]
    %v399 = vld [vmem:[#allocation8 + $0x74] sm:$0xf]
    %v400 = vld [vmem:[#allocation8 + $0x78] sm:$0xf]
    %v401 = vld [vmem:[#allocation8 + $0x7c] sm:$0xf]
    %v402 = vld [vmem:[#allocation8 + $0x80] sm:$0xf]
    %v403 = vld [vmem:[#allocation8 + $0x84] sm:$0xf]
    %v404 = vld [vmem:[#allocation8 + $0x88] sm:$0xf]
    %v405 = vld [vmem:[#allocation8 + $0x8c] sm:$0xf]
    %v406 = vld [vmem:[#allocation8 + $0x90] sm:$0xf]
    %v407 = vld [vmem:[#allocation8 + $0x94] sm:$0xf]
    %v408 = vld [vmem:[#allocation8 + $0x98] sm:$0xf]
    %v409 = vld [vmem:[#allocation8 + $0x9c] sm:$0xf]
    %v410 = vld [vmem:[#allocation8 + $0xa0] sm:$0xf]
    %v411 = vld [vmem:[#allocation8 + $0xa4] sm:$0xf]
    %v412 = vld [vmem:[#allocation8 + $0xa8] sm:$0xf]
    %v413 = vld [vmem:[#allocation8 + $0xac] sm:$0xf]
    %v414 = vld [vmem:[#allocation8 + $0xb0] sm:$0xf]
    %v415 = vld [vmem:[#allocation8 + $0xb4] sm:$0xf]
    %v416 = vld [vmem:[#allocation8 + $0xb8] sm:$0xf]
    %v417 = vld [vmem:[#allocation8 + $0xbc] sm:$0xf]
    %v418 = vld [vmem:[%s4] sm:$0x1]
    %v420 = vlaneseq
    %v421 = vshrl.u32 %v420, 7
    %v422 = vsub.s32 0, %v421
    %v423 = vrot.slane %v418, %v422
    %v429 = vunpack.c.l.b16 %v366
    %v430 = vunpack.c.h.b16 %v366
    %v431 = vunpack.c.l.b16 %v367
    %v432 = vunpack.c.l.b16 %v368
    %v433 = vunpack.c.h.b16 %v368
    %v434 = vunpack.c.l.b16 %v369
    %v435 = vpack.c.b16 %v432, %v429
    %v436 = vpack.c.b16 %v433, %v430
    %v437 = vpack.c.b16 %v434, %v431
    %v489 = vunpack.c.l.b16 %v370
    %v490 = vunpack.c.l.b16 %v371
    %v491 = vunpack.c.l.b16 %v372
    %v492 = vunpack.c.l.b16 %v373
    %v493 = vunpack.c.l.b16 %v374
    %v494 = vunpack.c.l.b16 %v375
    %v495 = vunpack.c.l.b16 %v376
    %v496 = vunpack.c.l.b16 %v377
    %v497 = vunpack.c.l.b16 %v378
    %v498 = vunpack.c.l.b16 %v379
    %v499 = vunpack.c.l.b16 %v380
    %v500 = vunpack.c.l.b16 %v381
    %v501 = vunpack.c.l.b16 %v382
    %v502 = vunpack.c.l.b16 %v383
    %v503 = vunpack.c.l.b16 %v384
    %v504 = vunpack.c.l.b16 %v385
    %v505 = vunpack.c.l.b16 %v386
    %v506 = vunpack.c.l.b16 %v387
    %v507 = vunpack.c.l.b16 %v388
    %v508 = vunpack.c.l.b16 %v389
    %v509 = vunpack.c.l.b16 %v390
    %v510 = vunpack.c.l.b16 %v391
    %v511 = vunpack.c.l.b16 %v392
    %v512 = vunpack.c.l.b16 %v393
    %v513 = vunpack.c.l.b16 %v394
    %v514 = vunpack.c.l.b16 %v395
    %v515 = vunpack.c.l.b16 %v396
    %v516 = vunpack.c.l.b16 %v397
    %v517 = vunpack.c.l.b16 %v398
    %v518 = vunpack.c.l.b16 %v399
    %v519 = vunpack.c.l.b16 %v400
    %v520 = vunpack.c.l.b16 %v401
    %v521 = vunpack.c.l.b16 %v402
    %v522 = vunpack.c.l.b16 %v403
    %v523 = vunpack.c.l.b16 %v404
    %v524 = vunpack.c.l.b16 %v405
    %v525 = vunpack.c.l.b16 %v406
    %v526 = vunpack.c.l.b16 %v407
    %v527 = vunpack.c.l.b16 %v408
    %v528 = vunpack.c.l.b16 %v409
    %v529 = vunpack.c.l.b16 %v410
    %v530 = vunpack.c.l.b16 %v411
    %v531 = vunpack.c.l.b16 %v412
    %v532 = vunpack.c.l.b16 %v413
    %v533 = vunpack.c.l.b16 %v414
    %v534 = vunpack.c.l.b16 %v415
    %v535 = vunpack.c.l.b16 %v416
    %v536 = vunpack.c.l.b16 %v417
    %v537 = vpack.c.b16 %v490, %v489
    %v538 = vpack.c.b16 %v492, %v491
    %v539 = vpack.c.b16 %v494, %v493
    %v540 = vpack.c.b16 %v496, %v495
    %v541 = vpack.c.b16 %v498, %v497
    %v542 = vpack.c.b16 %v500, %v499
    %v543 = vpack.c.b16 %v502, %v501
    %v544 = vpack.c.b16 %v504, %v503
    %v545 = vpack.c.b16 %v506, %v505
    %v546 = vpack.c.b16 %v508, %v507
    %v547 = vpack.c.b16 %v510, %v509
    %v548 = vpack.c.b16 %v512, %v511
    %v549 = vpack.c.b16 %v514, %v513
    %v550 = vpack.c.b16 %v516, %v515
    %v551 = vpack.c.b16 %v518, %v517
    %v552 = vpack.c.b16 %v520, %v519
    %v553 = vpack.c.b16 %v522, %v521
    %v554 = vpack.c.b16 %v524, %v523
    %v555 = vpack.c.b16 %v526, %v525
    %v556 = vpack.c.b16 %v528, %v527
    %v557 = vpack.c.b16 %v530, %v529
    %v558 = vpack.c.b16 %v532, %v531
    %v559 = vpack.c.b16 %v534, %v533
    %v560 = vpack.c.b16 %v536, %v535
    %585 = vmatprep.subr.bf16.mxu0 0
    %586 = vmatpush1.bf16.msra.mxu0 %v544
    %587 = vmatprep.subr.bf16.mxu0 0
    %588 = vmatpush1.bf16.msra.mxu0 %v543
    %589 = vmatprep.subr.bf16.mxu0 0
    %590 = vmatpush1.bf16.msra.mxu0 %v542
    %591 = vmatprep.subr.bf16.mxu0 0
    %592 = vmatpush1.bf16.msra.mxu0 %v541
    %593 = vmatprep.subr.bf16.mxu0 0
    %594 = vmatpush1.bf16.msra.mxu0 %v540
    %595 = vmatprep.subr.bf16.mxu0 0
    %596 = vmatpush1.bf16.msra.mxu0 %v539
    %597 = vmatprep.subr.bf16.mxu0 0
    %598 = vmatpush1.bf16.msra.mxu0 %v538
    %599 = vmatprep.subr.bf16.mxu0 0
    %600 = vmatpush1.bf16.msra.mxu0 %v537
    %601 = vmatprep.subr.bf16.mxu0 0
    %602 = vmatpush2.bf16.msra.mxu0 %v552
    %603 = vmatprep.subr.bf16.mxu0 0
    %604 = vmatpush2.bf16.msra.mxu0 %v551
    %605 = vmatprep.subr.bf16.mxu0 0
    %606 = vmatpush2.bf16.msra.mxu0 %v550
    %607 = vmatprep.subr.bf16.mxu0 0
    %608 = vmatpush2.bf16.msra.mxu0 %v549
    %609 = vmatprep.subr.bf16.mxu0 0
    %610 = vmatpush2.bf16.msra.mxu0 %v548
    %611 = vmatprep.subr.bf16.mxu0 0
    %612 = vmatpush2.bf16.msra.mxu0 %v547
    %613 = vmatprep.subr.bf16.mxu0 0
    %614 = vmatpush2.bf16.msra.mxu0 %v546
    %615 = vmatprep.subr.bf16.mxu0 0
    %616 = vmatpush2.bf16.msra.mxu0 %v545
    %617 = vmatprep.mubr.bf16.mxu0 %v436
    %618 = vmatmul.mubr.bf16.gmra.mxu0 %v435
    %v619 = vpop.f32.mrf.mxu0
    %v620 = vadd.f32 %v423, %v619
    %v621 = vpop.f32.mrf.mxu0
    %v622 = vpop.f32.mrf.mxu0
    %v623 = vadd.f32 %v423, %v622
    %v624 = vpop.f32.mrf.mxu0
    %625 = vdwg.mxu0
    %626 = vmatprep.subr.bf16.mxu0 0
    %627 = vmatpush1.bf16.msra.mxu0 %v560
    %628 = vmatprep.subr.bf16.mxu0 0
    %629 = vmatpush1.bf16.msra.mxu0 %v559
    %630 = vmatprep.subr.bf16.mxu0 0
    %631 = vmatpush1.bf16.msra.mxu0 %v558
    %632 = vmatprep.subr.bf16.mxu0 0
    %633 = vmatpush1.bf16.msra.mxu0 %v557
    %634 = vmatprep.subr.bf16.mxu0 0
    %635 = vmatpush1.bf16.msra.mxu0 %v556
    %636 = vmatprep.subr.bf16.mxu0 0
    %637 = vmatpush1.bf16.msra.mxu0 %v555
    %638 = vmatprep.subr.bf16.mxu0 0
    %639 = vmatpush1.bf16.msra.mxu0 %v554
    %640 = vmatprep.subr.bf16.mxu0 0
    %641 = vmatpush1.bf16.msra.mxu0 %v553
    %642 = vmatprep.subr.bf16.mxu0 0
    %643 = vmatpush2.bf16.msra.mxu0 0
    %644 = vmatprep.subr.bf16.mxu0 0
    %645 = vmatpush2.bf16.msra.mxu0 0
    %646 = vmatprep.subr.bf16.mxu0 0
    %647 = vmatpush2.bf16.msra.mxu0 0
    %648 = vmatprep.subr.bf16.mxu0 0
    %649 = vmatpush2.bf16.msra.mxu0 0
    %650 = vmatprep.subr.bf16.mxu0 0
    %651 = vmatpush2.bf16.msra.mxu0 0
    %652 = vmatprep.subr.bf16.mxu0 0
    %653 = vmatpush2.bf16.msra.mxu0 0
    %654 = vmatprep.subr.bf16.mxu0 0
    %655 = vmatpush2.bf16.msra.mxu0 0
    %656 = vmatprep.subr.bf16.mxu0 0
    %657 = vmatpush2.bf16.msra.mxu0 0
    %658 = vmatprep.mubr.bf16.mxu0 0
    %659 = vmatmul.mubr.bf16.gmra.mxu0 %v437
    %v660 = vpop.f32.mrf.mxu0
    %v661 = vadd.f32 %v620, %v660
    %v662 = vpop.f32.mrf.mxu0
    %v663 = vpop.f32.mrf.mxu0
    %v664 = vadd.f32 %v623, %v663
    %v665 = vpop.f32.mrf.mxu0
    %666 = vdwg.mxu0
    %v667 = vpack.c.bf16 %v664, %v661
    %v669 = vunpack.c.l.b16 %v667
    %v670 = vunpack.c.h.b16 %v667
    %v671 = vpack.c.b16 %v669, %v669
    %v672 = vpack.c.b16 %v670, %v670
    %675 = vst [vmem:[#allocation9] sm:$0xf] %v671
    %676 = vst [vmem:[#allocation9 + $0x4] sm:$0xf] %v672
    // Predicated region
    $region38: #{_mlp_adapter_jit.1} parent=1 // pred_check
      _
    $region39: #{_mlp_adapter_jit.1} parent=1 // pred_check_branch
      %678 = sbr.rel (0) target = $region41
    $region40: #{_mlp_adapter_jit.1} parent=1 // pred_region
      %s680 = ssub.s32 128, 128
      %681 = vsyncadd [#allocation5], %s680
      %s682 = sshll.u32 [#allocation9], 4
      %s683 = int_to_ptr.vmem [resolvable:$true] %s682
      %688 = dma.vmem_to_hbm [thread:$0]  %s683, 128, %s5, [#allocation5], 64, 64, 4
    $region41: #{_mlp_adapter_jit.1} parent=1 // pred_fallthru
      _
    // Predicated region
    $region42: #{_mlp_adapter_jit.1} parent=1 // pred_check
      _
    $region43: #{_mlp_adapter_jit.1} parent=1 // pred_check_branch
      %690 = sbr.rel (0) target = $region45
    $region44: #{_mlp_adapter_jit.1} parent=1 // pred_region
      %691 = dma.done [#allocation5], 128
    $region45: #{_mlp_adapter_jit.1} parent=1 // pred_fallthru
      _
    %692 = vsyncpa [#allocation4], 1
    %693 = vsyncpa [#allocation7], 1
    %694 = vsyncpa [#allocation5], 1

</llo_original>
